<compile_context>
chip_gen: v7x
topology: tpu7x:2x2x1
jax: 0.10.0
libtpu: 0.0.40
codegen_flags: <defaults>
</compile_context>

<pallas_src>
import functools

import jax
import jax.numpy as jnp
from jax.experimental import pallas as pl
from jax.experimental.pallas import tpu as pltpu

_LANE = 128


def _round_up(n, m):
    return ((n + m - 1) // m) * m


def _enc_kernel(x_ref,
                w1_ref, b1_ref,
                w2_ref, b2_ref,
                w3_ref, b3_ref,
                wh_ref, bh_ref,
                out_ref):
    """Whole forward pass for one batch tile; all operands resident in VMEM.

    x / weights are bf16 (or caller's compute dtype); biases are f32; every
    dot accumulates in f32. Intermediates are cast back to the weight dtype
    before the next matmul to keep the MXU in single-pass reduced precision.
    """
    cdt = w1_ref.dtype

    x = x_ref[...]

    # one -> ReLU -> (dropout = identity) -> sec
    h = jnp.dot(x, w1_ref[...], preferred_element_type=jnp.float32) + b1_ref[...]
    h = jnp.maximum(h, 0.0).astype(cdt)
    h = jnp.dot(h, w2_ref[...], preferred_element_type=jnp.float32) + b2_ref[...]

    # ReLU -> (dropout = identity) -> thr
    h = jnp.maximum(h, 0.0).astype(cdt)
    h = jnp.dot(h, w3_ref[...], preferred_element_type=jnp.float32) + b3_ref[...]

    # fused heads: [S | P], columns padded out to 128 lanes
    h = h.astype(cdt)
    out = jnp.dot(h, wh_ref[...], preferred_element_type=jnp.float32) + bh_ref[...]
    out_ref[...] = out.astype(out_ref.dtype)


@functools.partial(jax.jit, static_argnames=("block_b", "compute_dtype"))
def enc_model_forward(x, params, *, block_b=None, compute_dtype=jnp.bfloat16):
    """x: (B, i_shape). params: dict of (in,out) weights / (1,out) biases.

    Returns (shared, private) with shapes (B, z_dim) / (B, c_dim) in x.dtype.
    """
    B, i_shape = x.shape
    mid = params["w1"].shape[1]
    z_dim = params["ws"].shape[1]
    c_dim = params["wp"].shape[1]

    mid_pad = _round_up(mid, _LANE)
    out_dim = z_dim + c_dim
    out_pad = _round_up(out_dim, _LANE)

    # Adaptive batch tile: >= 2 grid steps (keeps both v7x TensorCores busy),
    # up to 1024 rows/step for large batches (near HBM roofline, tiny VMEM).
    if block_b is None:
        block_b = max(16, min(1024, _round_up(-(-B // 2), 16)))
    b_pad = _round_up(B, block_b)

    orig_dtype = x.dtype
    xp = x.astype(compute_dtype)
    if b_pad != B:  # only pad the remainder rows; skipped when block_b | B
        xp = jnp.pad(xp, ((0, b_pad - B), (0, 0)))

    def pad_w(a, rows, cols):
        a = a.astype(compute_dtype)
        return jnp.pad(a, ((0, rows - a.shape[0]), (0, cols - a.shape[1])))

    def pad_b(a, cols):
        a = a.astype(jnp.float32)
        return jnp.pad(a, ((0, 0), (0, cols - a.shape[1])))

    # Tiny, one-time (per trace) weight/bias padding; zero pad rows/cols and
    # zero biases preserve semantics exactly.
    w1 = pad_w(params["w1"], i_shape, mid_pad)
    b1 = pad_b(params["b1"], mid_pad)
    w2 = pad_w(params["w2"], mid_pad, mid_pad)
    b2 = pad_b(params["b2"], mid_pad)
    w3 = pad_w(params["w3"], mid_pad, mid_pad)
    b3 = pad_b(params["b3"], mid_pad)
    # Fused head weight / bias: [S | P] then pad columns to 128.
    wh = pad_w(jnp.concatenate([params["ws"], params["wp"]], axis=1),
               mid_pad, out_pad)
    bh = pad_b(jnp.concatenate([params["bs"], params["bp"]], axis=1), out_pad)

    grid = (b_pad // block_b,)

    # Weights & biases: constant index map -> resident across grid steps.
    full = lambda a: pl.BlockSpec(a.shape, lambda i: (0, 0))

    out = pl.pallas_call(
        _enc_kernel,
        grid_spec=pltpu.PrefetchScalarGridSpec(
            num_scalar_prefetch=0,
            grid=grid,
            in_specs=[
                # x block: last dim equals the full array dim (no 128 pad needed).
                pl.BlockSpec((block_b, i_shape), lambda i: (i, 0)),
                full(w1), full(b1),
                full(w2), full(b2),
                full(w3), full(b3),
                full(wh), full(bh),
            ],
            out_specs=pl.BlockSpec((block_b, out_pad), lambda i: (i, 0)),
        ),
        # bf16 output slab halves the padded (out_pad=128) write traffic.
        out_shape=jax.ShapeDtypeStruct((b_pad, out_pad), compute_dtype),
        compiler_params=pltpu.CompilerParams(
            dimension_semantics=("parallel",)),
    )(xp, w1, b1, w2, b2, w3, b3, wh, bh)

    shared = out[:B, :z_dim].astype(orig_dtype)
    private = out[:B, z_dim:out_dim].astype(orig_dtype)
    return shared, private


def init_params(key, i_shape, mid_shape, z_dim, c_dim, dtype=jnp.float32):
    """Deterministic init mimicking PyTorch nn.Linear defaults (U(-1/sqrt(in), 1/sqrt(in))).
    Weights stored as (in_features, out_features); biases as (1, out_features)."""
    def linear(key, fan_in, fan_out):
        kw, kb = jax.random.split(key)
        bound = 1.0 / jnp.sqrt(fan_in)
        w = jax.random.uniform(kw, (fan_in, fan_out), dtype, -bound, bound)
        b = jax.random.uniform(kb, (1, fan_out), dtype, -bound, bound)
        return w, b

    keys = jax.random.split(key, 5)
    w1, b1 = linear(keys[0], i_shape, mid_shape)    # one
    w2, b2 = linear(keys[1], mid_shape, mid_shape)  # sec
    w3, b3 = linear(keys[2], mid_shape, mid_shape)  # thr
    ws, bs = linear(keys[3], mid_shape, z_dim)      # S
    wp, bp = linear(keys[4], mid_shape, c_dim)      # P
    return dict(w1=w1, b1=b1, w2=w2, b2=b2, w3=w3, b3=b3,
                ws=ws, bs=bs, wp=wp, bp=bp)


def reference_forward(x, p):
    """Pure-JAX f32 reference (eval-mode dropout = identity)."""
    h = jnp.maximum(x @ p["w1"] + p["b1"], 0.0)
    h = h @ p["w2"] + p["b2"]
    h = jnp.maximum(h, 0.0)
    h = h @ p["w3"] + p["b3"]
    return h @ p["ws"] + p["bs"], h @ p["wp"] + p["bp"]


if __name__ == "__main__":
    # Small shapes consistent with the module: enc_model(i_shape, z_dim, c_dim, mid_shape, p)
    # With B=256 the adaptive tile picks block_b=128 -> grid=(2,), no batch pad.
    B, i_shape, mid_shape, z_dim, c_dim = 256, 64, 32, 16, 8

    key = jax.random.PRNGKey(0)
    kx, kp = jax.random.split(key)
    x = jax.random.normal(kx, (B, i_shape), dtype=jnp.float32)
    params = init_params(kp, i_shape, mid_shape, z_dim, c_dim)

    shared, private = enc_model_forward(x, params)
    jax.block_until_ready((shared, private))

    ref_s, ref_p = reference_forward(x, params)
    assert shared.shape == (B, z_dim) and private.shape == (B, c_dim)
    # bf16 inputs/weights with f32 accumulation vs f32 reference -> loose tolerance.
    assert jnp.allclose(shared, ref_s, atol=5e-2, rtol=5e-2)
    assert jnp.allclose(private, ref_p, atol=5e-2, rtol=5e-2)

    print("KERNEL_OK")
</pallas_src>

<mosaic_0001>
module attributes {stable_mosaic.version = 11 : i64} {
  func.func @_enc_kernel(%arg0: i32, %arg1: memref<128x64xbf16, #tpu.memory_space<vmem>>, %arg2: memref<64x128xbf16, #tpu.memory_space<vmem>>, %arg3: memref<1x128xf32, #tpu.memory_space<vmem>>, %arg4: memref<128x128xbf16, #tpu.memory_space<vmem>>, %arg5: memref<1x128xf32, #tpu.memory_space<vmem>>, %arg6: memref<128x128xbf16, #tpu.memory_space<vmem>>, %arg7: memref<1x128xf32, #tpu.memory_space<vmem>>, %arg8: memref<128x128xbf16, #tpu.memory_space<vmem>>, %arg9: memref<1x128xf32, #tpu.memory_space<vmem>>, %arg10: memref<128x128xbf16, #tpu.memory_space<vmem>>) attributes {dimension_semantics = [#tpu.dimension_semantics<parallel>], iteration_bounds = array<i64: 2>, scalar_prefetch = 0 : i64, scratch_operands = 0 : i64, tpu.core_type = #tpu.core_type<tc>, window_params = [{transform_indices = @transform_0, window_bounds = array<i64: 128, 64>}, {pipeline_mode = #tpu.pipeline_mode<synchronous>, transform_indices = @transform_1, window_bounds = array<i64: 64, 128>}, {pipeline_mode = #tpu.pipeline_mode<synchronous>, transform_indices = @transform_2, window_bounds = array<i64: 1, 128>}, {pipeline_mode = #tpu.pipeline_mode<synchronous>, transform_indices = @transform_3, window_bounds = array<i64: 128, 128>}, {pipeline_mode = #tpu.pipeline_mode<synchronous>, transform_indices = @transform_4, window_bounds = array<i64: 1, 128>}, {pipeline_mode = #tpu.pipeline_mode<synchronous>, transform_indices = @transform_5, window_bounds = array<i64: 128, 128>}, {pipeline_mode = #tpu.pipeline_mode<synchronous>, transform_indices = @transform_6, window_bounds = array<i64: 1, 128>}, {pipeline_mode = #tpu.pipeline_mode<synchronous>, transform_indices = @transform_7, window_bounds = array<i64: 128, 128>}, {pipeline_mode = #tpu.pipeline_mode<synchronous>, transform_indices = @transform_8, window_bounds = array<i64: 1, 128>}, {transform_indices = @transform_9, window_bounds = array<i64: 128, 128>}]} {
    %c0 = arith.constant 0 : index
    %c0_0 = arith.constant 0 : index
    %0 = vector.load %arg1[%c0, %c0_0] : memref<128x64xbf16, #tpu.memory_space<vmem>>, vector<128x64xbf16>
    %c0_1 = arith.constant 0 : index
    %c0_2 = arith.constant 0 : index
    %1 = vector.load %arg2[%c0_1, %c0_2] : memref<64x128xbf16, #tpu.memory_space<vmem>>, vector<64x128xbf16>
    %cst = arith.constant dense<0.000000e+00> : vector<128x128xf32>
    %2 = tpu.matmul %0, %1, %cst {dimension_numbers = #tpu.dot_dimension_numbers<[1], [0], [0], [1], [0, 0, 1, 1], [], []>} : vector<128x64xbf16>, vector<64x128xbf16>, vector<128x128xf32> -> vector<128x128xf32>
    %c0_3 = arith.constant 0 : index
    %c0_4 = arith.constant 0 : index
    %3 = vector.load %arg3[%c0_3, %c0_4] : memref<1x128xf32, #tpu.memory_space<vmem>>, vector<1x128xf32>
    %4 = vector.broadcast %3 : vector<1x128xf32> to vector<128x128xf32>
    %5 = arith.addf %2, %4 : vector<128x128xf32>
    %cst_5 = arith.constant 0.000000e+00 : f32
    %6 = vector.broadcast %cst_5 : f32 to vector<128x128xf32>
    %7 = arith.maximumf %5, %6 : vector<128x128xf32>
    %8 = arith.truncf %7 : vector<128x128xf32> to vector<128x128xbf16>
    %c0_6 = arith.constant 0 : index
    %c0_7 = arith.constant 0 : index
    %9 = vector.load %arg4[%c0_6, %c0_7] : memref<128x128xbf16, #tpu.memory_space<vmem>>, vector<128x128xbf16>
    %cst_8 = arith.constant dense<0.000000e+00> : vector<128x128xf32>
    %10 = tpu.matmul %8, %9, %cst_8 {dimension_numbers = #tpu.dot_dimension_numbers<[1], [0], [0], [1], [0, 0, 1, 1], [], []>} : vector<128x128xbf16>, vector<128x128xbf16>, vector<128x128xf32> -> vector<128x128xf32>
    %c0_9 = arith.constant 0 : index
    %c0_10 = arith.constant 0 : index
    %11 = vector.load %arg5[%c0_9, %c0_10] : memref<1x128xf32, #tpu.memory_space<vmem>>, vector<1x128xf32>
    %12 = vector.broadcast %11 : vector<1x128xf32> to vector<128x128xf32>
    %13 = arith.addf %10, %12 : vector<128x128xf32>
    %cst_11 = arith.constant 0.000000e+00 : f32
    %14 = vector.broadcast %cst_11 : f32 to vector<128x128xf32>
    %15 = arith.maximumf %13, %14 : vector<128x128xf32>
    %16 = arith.truncf %15 : vector<128x128xf32> to vector<128x128xbf16>
    %c0_12 = arith.constant 0 : index
    %c0_13 = arith.constant 0 : index
    %17 = vector.load %arg6[%c0_12, %c0_13] : memref<128x128xbf16, #tpu.memory_space<vmem>>, vector<128x128xbf16>
    %cst_14 = arith.constant dense<0.000000e+00> : vector<128x128xf32>
    %18 = tpu.matmul %16, %17, %cst_14 {dimension_numbers = #tpu.dot_dimension_numbers<[1], [0], [0], [1], [0, 0, 1, 1], [], []>} : vector<128x128xbf16>, vector<128x128xbf16>, vector<128x128xf32> -> vector<128x128xf32>
    %c0_15 = arith.constant 0 : index
    %c0_16 = arith.constant 0 : index
    %19 = vector.load %arg7[%c0_15, %c0_16] : memref<1x128xf32, #tpu.memory_space<vmem>>, vector<1x128xf32>
    %20 = vector.broadcast %19 : vector<1x128xf32> to vector<128x128xf32>
    %21 = arith.addf %18, %20 : vector<128x128xf32>
    %22 = arith.truncf %21 : vector<128x128xf32> to vector<128x128xbf16>
    %c0_17 = arith.constant 0 : index
    %c0_18 = arith.constant 0 : index
    %23 = vector.load %arg8[%c0_17, %c0_18] : memref<128x128xbf16, #tpu.memory_space<vmem>>, vector<128x128xbf16>
    %cst_19 = arith.constant dense<0.000000e+00> : vector<128x128xf32>
    %24 = tpu.matmul %22, %23, %cst_19 {dimension_numbers = #tpu.dot_dimension_numbers<[1], [0], [0], [1], [0, 0, 1, 1], [], []>} : vector<128x128xbf16>, vector<128x128xbf16>, vector<128x128xf32> -> vector<128x128xf32>
    %c0_20 = arith.constant 0 : index
    %c0_21 = arith.constant 0 : index
    %25 = vector.load %arg9[%c0_20, %c0_21] : memref<1x128xf32, #tpu.memory_space<vmem>>, vector<1x128xf32>
    %26 = vector.broadcast %25 : vector<1x128xf32> to vector<128x128xf32>
    %27 = arith.addf %24, %26 : vector<128x128xf32>
    %28 = arith.truncf %27 : vector<128x128xf32> to vector<128x128xbf16>
    %c0_22 = arith.constant 0 : index
    %c0_23 = arith.constant 0 : index
    %29 = vector.load %arg10[%c0_22, %c0_23] : memref<128x128xbf16, #tpu.memory_space<vmem>>, vector<128x128xbf16>
    tpu.vector_store %arg10[%c0_22, %c0_23], %28 {strides = array<i32>} : memref<128x128xbf16, #tpu.memory_space<vmem>>, vector<128x128xbf16>,
    return
  }
  func.func @transform_0(%arg0: i32) -> (i32, i32) {
    %c0_i32 = arith.constant 0 : i32
    %c0_i32_0 = arith.constant 0 : i32
    return %arg0, %c0_i32 : i32, i32
  }
  func.func @transform_1(%arg0: i32) -> (i32, i32) {
    %c0_i32 = arith.constant 0 : i32
    %c0_i32_0 = arith.constant 0 : i32
    %c0_i32_1 = arith.constant 0 : i32
    return %c0_i32, %c0_i32_0 : i32, i32
  }
  func.func @transform_2(%arg0: i32) -> (i32, i32) {
    %c0_i32 = arith.constant 0 : i32
    %c0_i32_0 = arith.constant 0 : i32
    %c0_i32_1 = arith.constant 0 : i32
    return %c0_i32, %c0_i32_0 : i32, i32
  }
  func.func @transform_3(%arg0: i32) -> (i32, i32) {
    %c0_i32 = arith.constant 0 : i32
    %c0_i32_0 = arith.constant 0 : i32
    %c0_i32_1 = arith.constant 0 : i32
    return %c0_i32, %c0_i32_0 : i32, i32
  }
  func.func @transform_4(%arg0: i32) -> (i32, i32) {
    %c0_i32 = arith.constant 0 : i32
    %c0_i32_0 = arith.constant 0 : i32
    %c0_i32_1 = arith.constant 0 : i32
    return %c0_i32, %c0_i32_0 : i32, i32
  }
  func.func @transform_5(%arg0: i32) -> (i32, i32) {
    %c0_i32 = arith.constant 0 : i32
    %c0_i32_0 = arith.constant 0 : i32
    %c0_i32_1 = arith.constant 0 : i32
    return %c0_i32, %c0_i32_0 : i32, i32
  }
  func.func @transform_6(%arg0: i32) -> (i32, i32) {
    %c0_i32 = arith.constant 0 : i32
    %c0_i32_0 = arith.constant 0 : i32
    %c0_i32_1 = arith.constant 0 : i32
    return %c0_i32, %c0_i32_0 : i32, i32
  }
  func.func @transform_7(%arg0: i32) -> (i32, i32) {
    %c0_i32 = arith.constant 0 : i32
    %c0_i32_0 = arith.constant 0 : i32
    %c0_i32_1 = arith.constant 0 : i32
    return %c0_i32, %c0_i32_0 : i32, i32
  }
  func.func @transform_8(%arg0: i32) -> (i32, i32) {
    %c0_i32 = arith.constant 0 : i32
    %c0_i32_0 = arith.constant 0 : i32
    %c0_i32_1 = arith.constant 0 : i32
    return %c0_i32, %c0_i32_0 : i32, i32
  }
  func.func @transform_9(%arg0: i32) -> (i32, i32) {
    %c0_i32 = arith.constant 0 : i32
    %c0_i32_0 = arith.constant 0 : i32
    return %arg0, %c0_i32 : i32, i32
  }
}

</mosaic_0001>

<llo_original>
// kernel: enc_model_forward.1
$region0: #{enc_model_forward.1}
  #allocation0 [shape = 'u32[]', space=smem, size = 0x4, offset = 0x4, fixed_abs, tag = 'smem constant byte address 0x4 - core index']
  #allocation1 [shape = 'u32[144,128]{1,0:T(1,128)}', space=vmem, size = 0x12000, scoped, tag = 'internal scratch']
  %s0 = inlined_call_operand.vmem [shape: bf16[256,64], index: 0, kind: input, shape index: {}]
  %s1 = inlined_call_operand.vmem [shape: bf16[64,128], index: 1, kind: input, shape index: {}]
  %s2 = inlined_call_operand.vmem [shape: f32[1,128], index: 2, kind: input, shape index: {}]
  %s3 = inlined_call_operand.vmem [shape: bf16[128,128], index: 3, kind: input, shape index: {}]
  %s4 = inlined_call_operand.vmem [shape: f32[1,128], index: 4, kind: input, shape index: {}]
  %s5 = inlined_call_operand.vmem [shape: bf16[128,128], index: 5, kind: input, shape index: {}]
  %s6 = inlined_call_operand.vmem [shape: f32[1,128], index: 6, kind: input, shape index: {}]
  %s7 = inlined_call_operand.vmem [shape: bf16[128,128], index: 7, kind: input, shape index: {}]
  %s8 = inlined_call_operand.vmem [shape: f32[1,128], index: 8, kind: input, shape index: {}]
  %s9 = inlined_call_operand.vmem [shape: bf16[256,128], index: 9, kind: output, shape index: {}]
  %s10 = sld [smem:[#allocation0]]
  $region69: #{enc_model_forward.1} parent=0
    _
  %s12 = ssub.s32 1, %s10
  %s13 = scalar_select 0, %s12, %s10
  loop: start=0, step=1, limit=4
  $region2: #{enc_model_forward.1} parent=0 // loop_pre_header
    _
  $region3: #{enc_model_forward.1} parent=0 // loop_header
    %s15 = sphi 0, %s19
    %p16 = scmp.ge.s32.totalorder %s15, 4
    %s25 = sphi 0, %s27
    %s28 = sphi 0, %s25
    %s29 = sphi 0, %s28
    %s45 = sphi 0, %s29
    %s49 = sphi 0, %s49
    %s51 = sphi 0, %s49
    %s52 = sphi 0, %s51
    %s66 = sphi 0, %s52
    %s70 = sphi 0, %s70
    %s72 = sphi 0, %s70
    %s73 = sphi 0, %s72
    %s87 = sphi 0, %s73
    %s91 = sphi 0, %s91
    %s93 = sphi 0, %s91
    %s94 = sphi 0, %s93
    %s108 = sphi 0, %s94
    %s112 = sphi 0, %s112
    %s114 = sphi 0, %s112
    %s115 = sphi 0, %s114
    %s129 = sphi 0, %s115
    %s133 = sphi 0, %s133
    %s135 = sphi 0, %s133
    %s136 = sphi 0, %s135
    %s150 = sphi 0, %s136
    %s154 = sphi 0, %s154
    %s156 = sphi 0, %s154
    %s157 = sphi 0, %s156
    %s171 = sphi 0, %s157
    %s175 = sphi 0, %s175
    %s177 = sphi 0, %s175
    %s178 = sphi 0, %s177
    %s192 = sphi 0, %s178
    %s196 = sphi 0, %s196
    %s198 = sphi 0, %s196
    %s199 = sphi 0, %s198
    %s213 = sphi 0, %s199
    %s219 = sphi 0, %s221
    %s222 = sphi 0, %s219
    %s223 = sphi 0, %s222
    %s239 = sphi 0, %s223
  $region4: #{enc_model_forward.1} parent=0 // loop_header_branch
    %18 = sbr.rel (%p16) target = $region8
  $region5: #{enc_model_forward.1} parent=0 // loop_body
    %s20 = ssub.s32 %s15, 1
    %s21 = ssub.s32 %s15, 2
    %s22 = sadd.s32 %s15, 1
    %s23 = ssub.s32 %s15, %s22
    %p24 = scmp.eq.s32.totalorder %s23, 0
    %s26 = sadd.s32 %s25, 1
    %s27 = scalar_select %p24, %s25, %s26
    %p30 = pneg %p24
    %p31 = scmp.eq.s32.totalorder %s15, 1
    %p32 = por %p30, %p31
    %p33 = scmp.ne.s32.totalorder %s25, %s28
    %p34 = scmp.eq.s32.totalorder %s15, 0
    %p35 = por %p33, %p34
    %p36 = scmp.ne.s32.totalorder %s25, %s28
    %p37 = scmp.eq.s32.totalorder %s20, 1
    %p38 = por %p36, %p37
    %p39 = scmp.ne.s32.totalorder %s28, %s29
    %p40 = scmp.eq.s32.totalorder %s20, 0
    %p41 = por %p39, %p40
    %p42 = scmp.ne.s32.totalorder %s28, %s29
    %p43 = scmp.eq.s32.totalorder %s21, 1
    %p44 = por %p42, %p43
    %p46 = scmp.ne.s32.totalorder %s29, %s45
    %p47 = scmp.eq.s32.totalorder %s21, 0
    %p48 = por %p46, %p47
    %s50 = sadd.s32 %s49, 1
    %p53 = scmp.eq.s32.totalorder %s15, 1
    %p54 = scmp.ne.s32.totalorder %s49, %s51
    %p55 = scmp.eq.s32.totalorder %s15, 0
    %p56 = por %p54, %p55
    %p57 = scmp.ne.s32.totalorder %s49, %s51
    %p58 = scmp.eq.s32.totalorder %s20, 1
    %p59 = por %p57, %p58
    %p60 = scmp.ne.s32.totalorder %s51, %s52
    %p61 = scmp.eq.s32.totalorder %s20, 0
    %p62 = por %p60, %p61
    %p63 = scmp.ne.s32.totalorder %s51, %s52
    %p64 = scmp.eq.s32.totalorder %s21, 1
    %p65 = por %p63, %p64
    %p67 = scmp.ne.s32.totalorder %s52, %s66
    %p68 = scmp.eq.s32.totalorder %s21, 0
    %p69 = por %p67, %p68
    %s71 = sadd.s32 %s70, 1
    %p74 = scmp.eq.s32.totalorder %s15, 1
    %p75 = scmp.ne.s32.totalorder %s70, %s72
    %p76 = scmp.eq.s32.totalorder %s15, 0
    %p77 = por %p75, %p76
    %p78 = scmp.ne.s32.totalorder %s70, %s72
    %p79 = scmp.eq.s32.totalorder %s20, 1
    %p80 = por %p78, %p79
    %p81 = scmp.ne.s32.totalorder %s72, %s73
    %p82 = scmp.eq.s32.totalorder %s20, 0
    %p83 = por %p81, %p82
    %p84 = scmp.ne.s32.totalorder %s72, %s73
    %p85 = scmp.eq.s32.totalorder %s21, 1
    %p86 = por %p84, %p85
    %p88 = scmp.ne.s32.totalorder %s73, %s87
    %p89 = scmp.eq.s32.totalorder %s21, 0
    %p90 = por %p88, %p89
    %s92 = sadd.s32 %s91, 1
    %p95 = scmp.eq.s32.totalorder %s15, 1
    %p96 = scmp.ne.s32.totalorder %s91, %s93
    %p97 = scmp.eq.s32.totalorder %s15, 0
    %p98 = por %p96, %p97
    %p99 = scmp.ne.s32.totalorder %s91, %s93
    %p100 = scmp.eq.s32.totalorder %s20, 1
    %p101 = por %p99, %p100
    %p102 = scmp.ne.s32.totalorder %s93, %s94
    %p103 = scmp.eq.s32.totalorder %s20, 0
    %p104 = por %p102, %p103
    %p105 = scmp.ne.s32.totalorder %s93, %s94
    %p106 = scmp.eq.s32.totalorder %s21, 1
    %p107 = por %p105, %p106
    %p109 = scmp.ne.s32.totalorder %s94, %s108
    %p110 = scmp.eq.s32.totalorder %s21, 0
    %p111 = por %p109, %p110
    %s113 = sadd.s32 %s112, 1
    %p116 = scmp.eq.s32.totalorder %s15, 1
    %p117 = scmp.ne.s32.totalorder %s112, %s114
    %p118 = scmp.eq.s32.totalorder %s15, 0
    %p119 = por %p117, %p118
    %p120 = scmp.ne.s32.totalorder %s112, %s114
    %p121 = scmp.eq.s32.totalorder %s20, 1
    %p122 = por %p120, %p121
    %p123 = scmp.ne.s32.totalorder %s114, %s115
    %p124 = scmp.eq.s32.totalorder %s20, 0
    %p125 = por %p123, %p124
    %p126 = scmp.ne.s32.totalorder %s114, %s115
    %p127 = scmp.eq.s32.totalorder %s21, 1
    %p128 = por %p126, %p127
    %p130 = scmp.ne.s32.totalorder %s115, %s129
    %p131 = scmp.eq.s32.totalorder %s21, 0
    %p132 = por %p130, %p131
    %s134 = sadd.s32 %s133, 1
    %p137 = scmp.eq.s32.totalorder %s15, 1
    %p138 = scmp.ne.s32.totalorder %s133, %s135
    %p139 = scmp.eq.s32.totalorder %s15, 0
    %p140 = por %p138, %p139
    %p141 = scmp.ne.s32.totalorder %s133, %s135
    %p142 = scmp.eq.s32.totalorder %s20, 1
    %p143 = por %p141, %p142
    %p144 = scmp.ne.s32.totalorder %s135, %s136
    %p145 = scmp.eq.s32.totalorder %s20, 0
    %p146 = por %p144, %p145
    %p147 = scmp.ne.s32.totalorder %s135, %s136
    %p148 = scmp.eq.s32.totalorder %s21, 1
    %p149 = por %p147, %p148
    %p151 = scmp.ne.s32.totalorder %s136, %s150
    %p152 = scmp.eq.s32.totalorder %s21, 0
    %p153 = por %p151, %p152
    %s155 = sadd.s32 %s154, 1
    %p158 = scmp.eq.s32.totalorder %s15, 1
    %p159 = scmp.ne.s32.totalorder %s154, %s156
    %p160 = scmp.eq.s32.totalorder %s15, 0
    %p161 = por %p159, %p160
    %p162 = scmp.ne.s32.totalorder %s154, %s156
    %p163 = scmp.eq.s32.totalorder %s20, 1
    %p164 = por %p162, %p163
    %p165 = scmp.ne.s32.totalorder %s156, %s157
    %p166 = scmp.eq.s32.totalorder %s20, 0
    %p167 = por %p165, %p166
    %p168 = scmp.ne.s32.totalorder %s156, %s157
    %p169 = scmp.eq.s32.totalorder %s21, 1
    %p170 = por %p168, %p169
    %p172 = scmp.ne.s32.totalorder %s157, %s171
    %p173 = scmp.eq.s32.totalorder %s21, 0
    %p174 = por %p172, %p173
    %s176 = sadd.s32 %s175, 1
    %p179 = scmp.eq.s32.totalorder %s15, 1
    %p180 = scmp.ne.s32.totalorder %s175, %s177
    %p181 = scmp.eq.s32.totalorder %s15, 0
    %p182 = por %p180, %p181
    %p183 = scmp.ne.s32.totalorder %s175, %s177
    %p184 = scmp.eq.s32.totalorder %s20, 1
    %p185 = por %p183, %p184
    %p186 = scmp.ne.s32.totalorder %s177, %s178
    %p187 = scmp.eq.s32.totalorder %s20, 0
    %p188 = por %p186, %p187
    %p189 = scmp.ne.s32.totalorder %s177, %s178
    %p190 = scmp.eq.s32.totalorder %s21, 1
    %p191 = por %p189, %p190
    %p193 = scmp.ne.s32.totalorder %s178, %s192
    %p194 = scmp.eq.s32.totalorder %s21, 0
    %p195 = por %p193, %p194
    %s197 = sadd.s32 %s196, 1
    %p200 = scmp.eq.s32.totalorder %s15, 1
    %p201 = scmp.ne.s32.totalorder %s196, %s198
    %p202 = scmp.eq.s32.totalorder %s15, 0
    %p203 = por %p201, %p202
    %p204 = scmp.ne.s32.totalorder %s196, %s198
    %p205 = scmp.eq.s32.totalorder %s20, 1
    %p206 = por %p204, %p205
    %p207 = scmp.ne.s32.totalorder %s198, %s199
    %p208 = scmp.eq.s32.totalorder %s20, 0
    %p209 = por %p207, %p208
    %p210 = scmp.ne.s32.totalorder %s198, %s199
    %p211 = scmp.eq.s32.totalorder %s21, 1
    %p212 = por %p210, %p211
    %p214 = scmp.ne.s32.totalorder %s199, %s213
    %p215 = scmp.eq.s32.totalorder %s21, 0
    %p216 = por %p214, %p215
    %s217 = ssub.s32 %s15, %s22
    %p218 = scmp.eq.s32.totalorder %s217, 0
    %s220 = sadd.s32 %s219, 1
    %s221 = scalar_select %p218, %s219, %s220
    %p224 = pneg %p218
    %p225 = scmp.eq.s32.totalorder %s15, 1
    %p226 = por %p224, %p225
    %p227 = scmp.ne.s32.totalorder %s219, %s222
    %p228 = scmp.eq.s32.totalorder %s15, 0
    %p229 = por %p227, %p228
    %p230 = scmp.ne.s32.totalorder %s219, %s222
    %p231 = scmp.eq.s32.totalorder %s20, 1
    %p232 = por %p230, %p231
    %p233 = scmp.ne.s32.totalorder %s222, %s223
    %p234 = scmp.eq.s32.totalorder %s20, 0
    %p235 = por %p233, %p234
    %p236 = scmp.ne.s32.totalorder %s222, %s223
    %p237 = scmp.eq.s32.totalorder %s21, 1
    %p238 = por %p236, %p237
    %p240 = scmp.ne.s32.totalorder %s223, %s239
    %p241 = scmp.eq.s32.totalorder %s21, 0
    %p242 = por %p240, %p241
    %p243 = scmp.le.s32.totalorder 1, %s15
    %p244 = scmp.lt.s32.totalorder %s15, 3
    %p245 = pnand %p243, %p244
    %p246 = pneg %p245
    // Predicated region
    $region9: #{enc_model_forward.1} parent=5 // pred_check
      _
    $region10: #{enc_model_forward.1} parent=5 // pred_check_branch
      %248 = sbr.rel (%p245) target = $region12
    $region11: #{enc_model_forward.1} parent=5 // pred_region
      %s249 = ssub.s32 %s15, 1
      // Predicated region
      $region13: #{enc_model_forward.1} parent=11 // pred_check
        %p250 = pneg %p62
      $region14: #{enc_model_forward.1} parent=11 // pred_check_branch
        %252 = sbr.rel (%p250) target = $region16
      $region15: #{enc_model_forward.1} parent=11 // pred_region
        _
      $region16: #{enc_model_forward.1} parent=11 // pred_fallthru
        _
      // Predicated region
      $region17: #{enc_model_forward.1} parent=11 // pred_check
        %p253 = pneg %p83
      $region18: #{enc_model_forward.1} parent=11 // pred_check_branch
        %255 = sbr.rel (%p253) target = $region20
      $region19: #{enc_model_forward.1} parent=11 // pred_region
        _
      $region20: #{enc_model_forward.1} parent=11 // pred_fallthru
        _
      // Predicated region
      $region21: #{enc_model_forward.1} parent=11 // pred_check
        %p256 = pneg %p104
      $region22: #{enc_model_forward.1} parent=11 // pred_check_branch
        %258 = sbr.rel (%p256) target = $region24
      $region23: #{enc_model_forward.1} parent=11 // pred_region
        _
      $region24: #{enc_model_forward.1} parent=11 // pred_fallthru
        _
      // Predicated region
      $region25: #{enc_model_forward.1} parent=11 // pred_check
        %p259 = pneg %p125
      $region26: #{enc_model_forward.1} parent=11 // pred_check_branch
        %261 = sbr.rel (%p259) target = $region28
      $region27: #{enc_model_forward.1} parent=11 // pred_region
        _
      $region28: #{enc_model_forward.1} parent=11 // pred_fallthru
        _
      // Predicated region
      $region29: #{enc_model_forward.1} parent=11 // pred_check
        %p262 = pneg %p146
      $region30: #{enc_model_forward.1} parent=11 // pred_check_branch
        %264 = sbr.rel (%p262) target = $region32
      $region31: #{enc_model_forward.1} parent=11 // pred_region
        _
      $region32: #{enc_model_forward.1} parent=11 // pred_fallthru
        _
      // Predicated region
      $region33: #{enc_model_forward.1} parent=11 // pred_check
        %p265 = pneg %p167
      $region34: #{enc_model_forward.1} parent=11 // pred_check_branch
        %267 = sbr.rel (%p265) target = $region36
      $region35: #{enc_model_forward.1} parent=11 // pred_region
        _
      $region36: #{enc_model_forward.1} parent=11 // pred_fallthru
        _
      // Predicated region
      $region37: #{enc_model_forward.1} parent=11 // pred_check
        %p268 = pneg %p188
      $region38: #{enc_model_forward.1} parent=11 // pred_check_branch
        %270 = sbr.rel (%p268) target = $region40
      $region39: #{enc_model_forward.1} parent=11 // pred_region
        _
      $region40: #{enc_model_forward.1} parent=11 // pred_fallthru
        _
      // Predicated region
      $region41: #{enc_model_forward.1} parent=11 // pred_check
        %p271 = pneg %p209
      $region42: #{enc_model_forward.1} parent=11 // pred_check_branch
        %273 = sbr.rel (%p271) target = $region44
      $region43: #{enc_model_forward.1} parent=11 // pred_region
        _
      $region44: #{enc_model_forward.1} parent=11 // pred_fallthru
        _
    $region12: #{enc_model_forward.1} parent=5 // pred_fallthru
      _
    %p274 = scmp.lt.s32.totalorder %s15, 2
    // Predicated region
    $region45: #{enc_model_forward.1} parent=5 // pred_check
      %p275 = pneg %p274
    $region46: #{enc_model_forward.1} parent=5 // pred_check_branch
      %277 = sbr.rel (%p275) target = $region48
    $region47: #{enc_model_forward.1} parent=5 // pred_region
      // Predicated region
      $region49: #{enc_model_forward.1} parent=47 // pred_check
        %p278 = pneg %p35
      $region50: #{enc_model_forward.1} parent=47 // pred_check_branch
        %280 = sbr.rel (%p278) target = $region52
      $region51: #{enc_model_forward.1} parent=47 // pred_region
        %s281 = smul.u32 16, %s15
        %p282 = scmp.lt.s32.totalorder %s281, 31
        %s283 = scalar_select %p282, %s281, 31
        %s284 = smul.addr %s283, 4
        %s285 = scalar_lea.vmem %s0, %s284
        %s286 = smul.u32 16, %s15
      $region52: #{enc_model_forward.1} parent=47 // pred_fallthru
        _
    $region48: #{enc_model_forward.1} parent=5 // pred_fallthru
      _
    %p287 = scmp.le.s32.totalorder 1, %s15
    %p288 = scmp.lt.s32.totalorder %s15, 3
    %p289 = pnand %p287, %p288
    %p290 = pneg %p289
    // Predicated region
    $region53: #{enc_model_forward.1} parent=5 // pred_check
      _
    $region54: #{enc_model_forward.1} parent=5 // pred_check_branch
      %292 = sbr.rel (%p289) target = $region56
    $region55: #{enc_model_forward.1} parent=5 // pred_region
      %s293 = ssub.s32 %s15, 1
      %s294 = smul.u32 16, %s20
      %p295 = scmp.lt.s32.totalorder %s294, 31
      %s296 = scalar_select %p295, %s294, 31
      %s297 = smul.addr %s296, 4
      %s298 = scalar_lea.vmem %s0, %s297
      %p299 = pneg %p41
      %p300 = pneg %p38
      %p301 = pneg %p62
      %p302 = pneg %p59
      %p303 = pneg %p83
      %p304 = pneg %p80
      %p305 = pneg %p104
      %p306 = pneg %p101
      %p307 = pneg %p125
      %p308 = pneg %p122
      %p309 = pneg %p146
      %p310 = pneg %p143
      %p311 = pneg %p167
      %p312 = pneg %p164
      %p313 = pneg %p188
      %p314 = pneg %p185
      %p315 = pneg %p209
      %p316 = pneg %p206
      %p317 = pneg %p235
      %p318 = pneg %p232
      %s319 = smul.u32 16, %s20
      %p320 = scmp.lt.s32.totalorder %s319, 31
      %s321 = scalar_select %p320, %s319, 31
      %s322 = smul.addr %s321, 4
      %s323 = scalar_lea.vmem %s9, %s322
      %s324 = smul.u32 16, %s20
      %p325 = scmp.lt.s32.totalorder %s324, 31
      %s326 = scalar_select %p325, %s324, 31
      %s327 = smul.addr %s326, 4
      %s328 = scalar_lea.vmem %s0, %s327
      %s329 = smul.u32 16, %s20
      %s330 = smul.u32 16, %s20
      %p331 = scmp.lt.s32.totalorder %s330, 31
      %s332 = scalar_select %p331, %s330, 31
      %s333 = smul.addr %s332, 4
      %s334 = scalar_lea.vmem %s9, %s333
      %s335 = smul.u32 16, %s20
      %v337 = vld [vmem:[%s328] sm:$0xf]
      %v338 = vld [vmem:[%s328 + $0x4] sm:$0xf]
      %v339 = vld [vmem:[%s328 + $0x8] sm:$0xf]
      %v340 = vld [vmem:[%s328 + $0xc] sm:$0xf]
      %v341 = vld [vmem:[%s328 + $0x10] sm:$0xf]
      %v342 = vld [vmem:[%s328 + $0x14] sm:$0xf]
      %v343 = vld [vmem:[%s328 + $0x18] sm:$0xf]
      %v344 = vld [vmem:[%s328 + $0x1c] sm:$0xf]
      %v345 = vld [vmem:[%s328 + $0x20] sm:$0xf]
      %v346 = vld [vmem:[%s328 + $0x24] sm:$0xf]
      %v347 = vld [vmem:[%s328 + $0x28] sm:$0xf]
      %v348 = vld [vmem:[%s328 + $0x2c] sm:$0xf]
      %v349 = vld [vmem:[%s328 + $0x30] sm:$0xf]
      %v350 = vld [vmem:[%s328 + $0x34] sm:$0xf]
      %v351 = vld [vmem:[%s328 + $0x38] sm:$0xf]
      %v352 = vld [vmem:[%s328 + $0x3c] sm:$0xf]
      %v353 = vld [vmem:[%s1] sm:$0xf]
      %v354 = vld [vmem:[%s1 + $0x4] sm:$0xf]
      %v355 = vld [vmem:[%s1 + $0x8] sm:$0xf]
      %v356 = vld [vmem:[%s1 + $0xc] sm:$0xf]
      %v357 = vld [vmem:[%s1 + $0x10] sm:$0xf]
      %v358 = vld [vmem:[%s1 + $0x14] sm:$0xf]
      %v359 = vld [vmem:[%s1 + $0x18] sm:$0xf]
      %v360 = vld [vmem:[%s1 + $0x1c] sm:$0xf]
      %v361 = vld [vmem:[%s2] sm:$0x1]
      %v363 = vlaneseq
      %v364 = vshrl.u32 %v363, 7
      %v365 = vsub.s32 0, %v364
      %v366 = vrot.slane %v361, %v365
      %v384 = vunpack.c.l.b16 %v337
      %v385 = vunpack.c.l.b16 %v338
      %v386 = vunpack.c.l.b16 %v339
      %v387 = vunpack.c.l.b16 %v340
      %v388 = vunpack.c.l.b16 %v341
      %v389 = vunpack.c.l.b16 %v342
      %v390 = vunpack.c.l.b16 %v343
      %v391 = vunpack.c.l.b16 %v344
      %v392 = vunpack.c.l.b16 %v345
      %v393 = vunpack.c.l.b16 %v346
      %v394 = vunpack.c.l.b16 %v347
      %v395 = vunpack.c.l.b16 %v348
      %v396 = vunpack.c.l.b16 %v349
      %v397 = vunpack.c.l.b16 %v350
      %v398 = vunpack.c.l.b16 %v351
      %v399 = vunpack.c.l.b16 %v352
      %v400 = vpack.c.b16 %v385, %v384
      %v401 = vpack.c.b16 %v387, %v386
      %v402 = vpack.c.b16 %v389, %v388
      %v403 = vpack.c.b16 %v391, %v390
      %v404 = vpack.c.b16 %v393, %v392
      %v405 = vpack.c.b16 %v395, %v394
      %v406 = vpack.c.b16 %v397, %v396
      %v407 = vpack.c.b16 %v399, %v398
      %v416 = vunpack.c.l.b16 %v353
      %v417 = vunpack.c.l.b16 %v354
      %v418 = vunpack.c.l.b16 %v355
      %v419 = vunpack.c.l.b16 %v356
      %v420 = vunpack.c.l.b16 %v357
      %v421 = vunpack.c.l.b16 %v358
      %v422 = vunpack.c.l.b16 %v359
      %v423 = vunpack.c.l.b16 %v360
      %v424 = vpack.c.b16 %v417, %v416
      %v425 = vpack.c.b16 %v419, %v418
      %v426 = vpack.c.b16 %v421, %v420
      %v427 = vpack.c.b16 %v423, %v422
      %vm432 = vcmask 523264
      %v434 = vsel %vm432, %v400, 0
      %v437 = vsel %vm432, %v401, 0
      %v440 = vsel %vm432, %v402, 0
      %v443 = vsel %vm432, %v403, 0
      %v446 = vsel %vm432, %v404, 0
      %v449 = vsel %vm432, %v405, 0
      %v452 = vsel %vm432, %v406, 0
      %v455 = vsel %vm432, %v407, 0
      %457 = vmatprep.subr.bf16.mxu0 0
      %458 = vmatpush1.bf16.msra.mxu0 %v424
      %459 = vmatprep.subr.bf16.mxu0 0
      %460 = vmatpush1.bf16.msra.mxu0 %v425
      %461 = vmatprep.subr.bf16.mxu0 0
      %462 = vmatpush1.bf16.msra.mxu0 %v426
      %463 = vmatprep.subr.bf16.mxu0 0
      %464 = vmatpush1.bf16.msra.mxu0 %v427
      %465 = vmatprep.subr.bf16.mxu0 0
      %466 = vmatpush1.bf16.msra.mxu0 0
      %467 = vmatprep.subr.bf16.mxu0 0
      %468 = vmatpush1.bf16.msra.mxu0 0
      %469 = vmatprep.subr.bf16.mxu0 0
      %470 = vmatpush1.bf16.msra.mxu0 0
      %471 = vmatprep.subr.bf16.mxu0 0
      %472 = vmatpush1.bf16.msra.mxu0 0
      %473 = vmatprep.subr.bf16.mxu0 0
      %474 = vmatpush1.bf16.msra.mxu0 0
      %475 = vmatprep.subr.bf16.mxu0 0
      %476 = vmatpush1.bf16.msra.mxu0 0
      %477 = vmatprep.subr.bf16.mxu0 0
      %478 = vmatpush1.bf16.msra.mxu0 0
      %479 = vmatprep.subr.bf16.mxu0 0
      %480 = vmatpush1.bf16.msra.mxu0 0
      %481 = vmatprep.subr.bf16.mxu0 0
      %482 = vmatpush1.bf16.msra.mxu0 0
      %483 = vmatprep.subr.bf16.mxu0 0
      %484 = vmatpush1.bf16.msra.mxu0 0
      %485 = vmatprep.subr.bf16.mxu0 0
      %486 = vmatpush1.bf16.msra.mxu0 0
      %487 = vmatprep.subr.bf16.mxu0 0
      %488 = vmatpush1.bf16.msra.mxu0 0
      %489 = vmatprep.mubr.bf16.mxu0 0
      %490 = vmatmul.mubr.bf16.gmra.mrb[0].mxu0 %v434
      %v491 = vpop.f32.mrb[0].mxu0
      %v492 = vadd.f32 %v366, %v491
      %v493 = vpop.f32.mrb[0].mxu0
      %v494 = vpop.f32.mrb[0].mxu0
      %v495 = vadd.f32 %v366, %v494
      %v496 = vpop.f32.mrb[0].mxu0
      %497 = vmatprep.mubr.bf16.mxu0 0
      %498 = vmatmul.mubr.bf16.gmra.mrb[0].mxu0 %v437
      %v499 = vpop.f32.mrb[0].mxu0
      %v500 = vadd.f32 %v366, %v499
      %v501 = vpop.f32.mrb[0].mxu0
      %v502 = vpop.f32.mrb[0].mxu0
      %v503 = vadd.f32 %v366, %v502
      %v504 = vpop.f32.mrb[0].mxu0
      %505 = vmatprep.mubr.bf16.mxu0 0
      %506 = vmatmul.mubr.bf16.gmra.mrb[0].mxu0 %v440
      %v507 = vpop.f32.mrb[0].mxu0
      %v508 = vadd.f32 %v366, %v507
      %v509 = vpop.f32.mrb[0].mxu0
      %v510 = vpop.f32.mrb[0].mxu0
      %v511 = vadd.f32 %v366, %v510
      %v512 = vpop.f32.mrb[0].mxu0
      %513 = vmatprep.mubr.bf16.mxu0 0
      %514 = vmatmul.mubr.bf16.gmra.mrb[0].mxu0 %v443
      %v515 = vpop.f32.mrb[0].mxu0
      %v516 = vadd.f32 %v366, %v515
      %v517 = vpop.f32.mrb[0].mxu0
      %v518 = vpop.f32.mrb[0].mxu0
      %v519 = vadd.f32 %v366, %v518
      %v520 = vpop.f32.mrb[0].mxu0
      %521 = vmatprep.mubr.bf16.mxu0 0
      %522 = vmatmul.mubr.bf16.gmra.mrb[0].mxu0 %v446
      %v523 = vpop.f32.mrb[0].mxu0
      %v524 = vadd.f32 %v366, %v523
      %v525 = vpop.f32.mrb[0].mxu0
      %v526 = vpop.f32.mrb[0].mxu0
      %v527 = vadd.f32 %v366, %v526
      %v528 = vpop.f32.mrb[0].mxu0
      %529 = vmatprep.mubr.bf16.mxu0 0
      %530 = vmatmul.mubr.bf16.gmra.mrb[0].mxu0 %v449
      %v531 = vpop.f32.mrb[0].mxu0
      %v532 = vadd.f32 %v366, %v531
      %v533 = vpop.f32.mrb[0].mxu0
      %v534 = vpop.f32.mrb[0].mxu0
      %v535 = vadd.f32 %v366, %v534
      %v536 = vpop.f32.mrb[0].mxu0
      %537 = vmatprep.mubr.bf16.mxu0 0
      %538 = vmatmul.mubr.bf16.gmra.mrb[0].mxu0 %v452
      %v539 = vpop.f32.mrb[0].mxu0
      %v540 = vadd.f32 %v366, %v539
      %v541 = vpop.f32.mrb[0].mxu0
      %v542 = vpop.f32.mrb[0].mxu0
      %v543 = vadd.f32 %v366, %v542
      %v544 = vpop.f32.mrb[0].mxu0
      %545 = vmatprep.mubr.bf16.mxu0 0
      %546 = vmatmul.mubr.bf16.gmra.mrb[0].mxu0 %v455
      %v547 = vpop.f32.mrb[0].mxu0
      %v548 = vadd.f32 %v366, %v547
      %v549 = vpop.f32.mrb[0].mxu0
      %v550 = vpop.f32.mrb[0].mxu0
      %v551 = vadd.f32 %v366, %v550
      %v552 = vpop.f32.mrb[0].mxu0
      %553 = vdwg.mxu0
      %v554 = vmax.f32 %v492, 0.0
      %v555 = vmax.f32 %v495, 0.0
      %v556 = vmax.f32 %v500, 0.0
      %v557 = vmax.f32 %v503, 0.0
      %v558 = vmax.f32 %v508, 0.0
      %v559 = vmax.f32 %v511, 0.0
      %v560 = vmax.f32 %v516, 0.0
      %v561 = vmax.f32 %v519, 0.0
      %v562 = vmax.f32 %v524, 0.0
      %v563 = vmax.f32 %v527, 0.0
      %v564 = vmax.f32 %v532, 0.0
      %v565 = vmax.f32 %v535, 0.0
      %v566 = vmax.f32 %v540, 0.0
      %v567 = vmax.f32 %v543, 0.0
      %v568 = vmax.f32 %v548, 0.0
      %v569 = vmax.f32 %v551, 0.0
      %v570 = vpack.c.bf16 %v555, %v554
      %v571 = vpack.c.bf16 %v557, %v556
      %v572 = vpack.c.bf16 %v559, %v558
      %v573 = vpack.c.bf16 %v561, %v560
      %v574 = vpack.c.bf16 %v563, %v562
      %v575 = vpack.c.bf16 %v565, %v564
      %v576 = vpack.c.bf16 %v567, %v566
      %v577 = vpack.c.bf16 %v569, %v568
      %v578 = vld [vmem:[%s3] sm:$0xf]
      %v579 = vld [vmem:[%s3 + $0x4] sm:$0xf]
      %v580 = vld [vmem:[%s3 + $0x8] sm:$0xf]
      %v581 = vld [vmem:[%s3 + $0xc] sm:$0xf]
      %v582 = vld [vmem:[%s3 + $0x10] sm:$0xf]
      %v583 = vld [vmem:[%s3 + $0x14] sm:$0xf]
      %v584 = vld [vmem:[%s3 + $0x18] sm:$0xf]
      %v585 = vld [vmem:[%s3 + $0x1c] sm:$0xf]
      %v586 = vld [vmem:[%s3 + $0x20] sm:$0xf]
      %v587 = vld [vmem:[%s3 + $0x24] sm:$0xf]
      %v588 = vld [vmem:[%s3 + $0x28] sm:$0xf]
      %v589 = vld [vmem:[%s3 + $0x2c] sm:$0xf]
      %v590 = vld [vmem:[%s3 + $0x30] sm:$0xf]
      %v591 = vld [vmem:[%s3 + $0x34] sm:$0xf]
      %v592 = vld [vmem:[%s3 + $0x38] sm:$0xf]
      %v593 = vld [vmem:[%s3 + $0x3c] sm:$0xf]
      %v594 = vld [vmem:[%s4] sm:$0x1]
      %v596 = vlaneseq
      %v597 = vshrl.u32 %v596, 7
      %v598 = vsub.s32 0, %v597
      %v599 = vrot.slane %v594, %v598
      %v617 = vunpack.c.l.b16 %v578
      %v618 = vunpack.c.l.b16 %v579
      %v619 = vunpack.c.l.b16 %v580
      %v620 = vunpack.c.l.b16 %v581
      %v621 = vunpack.c.l.b16 %v582
      %v622 = vunpack.c.l.b16 %v583
      %v623 = vunpack.c.l.b16 %v584
      %v624 = vunpack.c.l.b16 %v585
      %v625 = vunpack.c.l.b16 %v586
      %v626 = vunpack.c.l.b16 %v587
      %v627 = vunpack.c.l.b16 %v588
      %v628 = vunpack.c.l.b16 %v589
      %v629 = vunpack.c.l.b16 %v590
      %v630 = vunpack.c.l.b16 %v591
      %v631 = vunpack.c.l.b16 %v592
      %v632 = vunpack.c.l.b16 %v593
      %v633 = vpack.c.b16 %v618, %v617
      %v634 = vpack.c.b16 %v620, %v619
      %v635 = vpack.c.b16 %v622, %v621
      %v636 = vpack.c.b16 %v624, %v623
      %v637 = vpack.c.b16 %v626, %v625
      %v638 = vpack.c.b16 %v628, %v627
      %v639 = vpack.c.b16 %v630, %v629
      %v640 = vpack.c.b16 %v632, %v631
      %649 = vmatprep.subr.bf16.mxu0 0
      %650 = vmatpush1.bf16.msra.mxu0 %v633
      %651 = vmatprep.subr.bf16.mxu0 0
      %652 = vmatpush1.bf16.msra.mxu0 %v634
      %653 = vmatprep.subr.bf16.mxu0 0
      %654 = vmatpush1.bf16.msra.mxu0 %v635
      %655 = vmatprep.subr.bf16.mxu0 0
      %656 = vmatpush1.bf16.msra.mxu0 %v636
      %657 = vmatprep.subr.bf16.mxu0 0
      %658 = vmatpush1.bf16.msra.mxu0 %v637
      %659 = vmatprep.subr.bf16.mxu0 0
      %660 = vmatpush1.bf16.msra.mxu0 %v638
      %661 = vmatprep.subr.bf16.mxu0 0
      %662 = vmatpush1.bf16.msra.mxu0 %v639
      %663 = vmatprep.subr.bf16.mxu0 0
      %664 = vmatpush1.bf16.msra.mxu0 %v640
      %665 = vmatprep.subr.bf16.mxu0 0
      %666 = vmatpush1.bf16.msra.mxu0 0
      %667 = vmatprep.subr.bf16.mxu0 0
      %668 = vmatpush1.bf16.msra.mxu0 0
      %669 = vmatprep.subr.bf16.mxu0 0
      %670 = vmatpush1.bf16.msra.mxu0 0
      %671 = vmatprep.subr.bf16.mxu0 0
      %672 = vmatpush1.bf16.msra.mxu0 0
      %673 = vmatprep.subr.bf16.mxu0 0
      %674 = vmatpush1.bf16.msra.mxu0 0
      %675 = vmatprep.subr.bf16.mxu0 0
      %676 = vmatpush1.bf16.msra.mxu0 0
      %677 = vmatprep.subr.bf16.mxu0 0
      %678 = vmatpush1.bf16.msra.mxu0 0
      %679 = vmatprep.subr.bf16.mxu0 0
      %680 = vmatpush1.bf16.msra.mxu0 0
      %681 = vmatprep.mubr.bf16.mxu0 0
      %682 = vmatmul.mubr.bf16.gmra.mrb[0].mxu0 %v570
      %v683 = vpop.f32.mrb[0].mxu0
      %v684 = vadd.f32 %v599, %v683
      %v685 = vpop.f32.mrb[0].mxu0
      %v686 = vpop.f32.mrb[0].mxu0
      %v687 = vadd.f32 %v599, %v686
      %v688 = vpop.f32.mrb[0].mxu0
      %689 = vmatprep.mubr.bf16.mxu0 0
      %690 = vmatmul.mubr.bf16.gmra.mrb[0].mxu0 %v571
      %v691 = vpop.f32.mrb[0].mxu0
      %v692 = vadd.f32 %v599, %v691
      %v693 = vpop.f32.mrb[0].mxu0
      %v694 = vpop.f32.mrb[0].mxu0
      %v695 = vadd.f32 %v599, %v694
      %v696 = vpop.f32.mrb[0].mxu0
      %697 = vmatprep.mubr.bf16.mxu0 0
      %698 = vmatmul.mubr.bf16.gmra.mrb[0].mxu0 %v572
      %v699 = vpop.f32.mrb[0].mxu0
      %v700 = vadd.f32 %v599, %v699
      %v701 = vpop.f32.mrb[0].mxu0
      %v702 = vpop.f32.mrb[0].mxu0
      %v703 = vadd.f32 %v599, %v702
      %v704 = vpop.f32.mrb[0].mxu0
      %705 = vmatprep.mubr.bf16.mxu0 0
      %706 = vmatmul.mubr.bf16.gmra.mrb[0].mxu0 %v573
      %v707 = vpop.f32.mrb[0].mxu0
      %v708 = vadd.f32 %v599, %v707
      %v709 = vpop.f32.mrb[0].mxu0
      %v710 = vpop.f32.mrb[0].mxu0
      %v711 = vadd.f32 %v599, %v710
      %v712 = vpop.f32.mrb[0].mxu0
      %713 = vmatprep.mubr.bf16.mxu0 0
      %714 = vmatmul.mubr.bf16.gmra.mrb[0].mxu0 %v574
      %v715 = vpop.f32.mrb[0].mxu0
      %v716 = vadd.f32 %v599, %v715
      %v717 = vpop.f32.mrb[0].mxu0
      %v718 = vpop.f32.mrb[0].mxu0
      %v719 = vadd.f32 %v599, %v718
      %v720 = vpop.f32.mrb[0].mxu0
      %721 = vmatprep.mubr.bf16.mxu0 0
      %722 = vmatmul.mubr.bf16.gmra.mrb[0].mxu0 %v575
      %v723 = vpop.f32.mrb[0].mxu0
      %v724 = vadd.f32 %v599, %v723
      %v725 = vpop.f32.mrb[0].mxu0
      %v726 = vpop.f32.mrb[0].mxu0
      %v727 = vadd.f32 %v599, %v726
      %v728 = vpop.f32.mrb[0].mxu0
      %729 = vmatprep.mubr.bf16.mxu0 0
      %730 = vmatmul.mubr.bf16.gmra.mrb[0].mxu0 %v576
      %v731 = vpop.f32.mrb[0].mxu0
      %v732 = vadd.f32 %v599, %v731
      %v733 = vpop.f32.mrb[0].mxu0
      %v734 = vpop.f32.mrb[0].mxu0
      %v735 = vadd.f32 %v599, %v734
      %v736 = vpop.f32.mrb[0].mxu0
      %737 = vmatprep.mubr.bf16.mxu0 0
      %738 = vmatmul.mubr.bf16.gmra.mrb[0].mxu0 %v577
      %v739 = vpop.f32.mrb[0].mxu0
      %v740 = vadd.f32 %v599, %v739
      %v741 = vpop.f32.mrb[0].mxu0
      %v742 = vpop.f32.mrb[0].mxu0
      %v743 = vadd.f32 %v599, %v742
      %v744 = vpop.f32.mrb[0].mxu0
      %745 = vdwg.mxu0
      %v746 = vmax.f32 %v684, 0.0
      %v747 = vmax.f32 %v687, 0.0
      %v748 = vmax.f32 %v692, 0.0
      %v749 = vmax.f32 %v695, 0.0
      %v750 = vmax.f32 %v700, 0.0
      %v751 = vmax.f32 %v703, 0.0
      %v752 = vmax.f32 %v708, 0.0
      %v753 = vmax.f32 %v711, 0.0
      %v754 = vmax.f32 %v716, 0.0
      %v755 = vmax.f32 %v719, 0.0
      %v756 = vmax.f32 %v724, 0.0
      %v757 = vmax.f32 %v727, 0.0
      %v758 = vmax.f32 %v732, 0.0
      %v759 = vmax.f32 %v735, 0.0
      %v760 = vmax.f32 %v740, 0.0
      %v761 = vmax.f32 %v743, 0.0
      %v762 = vpack.c.bf16 %v747, %v746
      %v763 = vpack.c.bf16 %v749, %v748
      %v764 = vpack.c.bf16 %v751, %v750
      %v765 = vpack.c.bf16 %v753, %v752
      %v766 = vpack.c.bf16 %v755, %v754
      %v767 = vpack.c.bf16 %v757, %v756
      %v768 = vpack.c.bf16 %v759, %v758
      %v769 = vpack.c.bf16 %v761, %v760
      %v770 = vld [vmem:[%s5] sm:$0xf]
      %v771 = vld [vmem:[%s5 + $0x4] sm:$0xf]
      %v772 = vld [vmem:[%s5 + $0x8] sm:$0xf]
      %v773 = vld [vmem:[%s5 + $0xc] sm:$0xf]
      %v774 = vld [vmem:[%s5 + $0x10] sm:$0xf]
      %v775 = vld [vmem:[%s5 + $0x14] sm:$0xf]
      %v776 = vld [vmem:[%s5 + $0x18] sm:$0xf]
      %v777 = vld [vmem:[%s5 + $0x1c] sm:$0xf]
      %v778 = vld [vmem:[%s5 + $0x20] sm:$0xf]
      %v779 = vld [vmem:[%s5 + $0x24] sm:$0xf]
      %v780 = vld [vmem:[%s5 + $0x28] sm:$0xf]
      %v781 = vld [vmem:[%s5 + $0x2c] sm:$0xf]
      %v782 = vld [vmem:[%s5 + $0x30] sm:$0xf]
      %v783 = vld [vmem:[%s5 + $0x34] sm:$0xf]
      %v784 = vld [vmem:[%s5 + $0x38] sm:$0xf]
      %v785 = vld [vmem:[%s5 + $0x3c] sm:$0xf]
      %v786 = vld [vmem:[%s6] sm:$0x1]
      %v788 = vlaneseq
      %v789 = vshrl.u32 %v788, 7
      %v790 = vsub.s32 0, %v789
      %v791 = vrot.slane %v786, %v790
      %v809 = vunpack.c.l.b16 %v770
      %v810 = vunpack.c.l.b16 %v771
      %v811 = vunpack.c.l.b16 %v772
      %v812 = vunpack.c.l.b16 %v773
      %v813 = vunpack.c.l.b16 %v774
      %v814 = vunpack.c.l.b16 %v775
      %v815 = vunpack.c.l.b16 %v776
      %v816 = vunpack.c.l.b16 %v777
      %v817 = vunpack.c.l.b16 %v778
      %v818 = vunpack.c.l.b16 %v779
      %v819 = vunpack.c.l.b16 %v780
      %v820 = vunpack.c.l.b16 %v781
      %v821 = vunpack.c.l.b16 %v782
      %v822 = vunpack.c.l.b16 %v783
      %v823 = vunpack.c.l.b16 %v784
      %v824 = vunpack.c.l.b16 %v785
      %v825 = vpack.c.b16 %v810, %v809
      %v826 = vpack.c.b16 %v812, %v811
      %v827 = vpack.c.b16 %v814, %v813
      %v828 = vpack.c.b16 %v816, %v815
      %v829 = vpack.c.b16 %v818, %v817
      %v830 = vpack.c.b16 %v820, %v819
      %v831 = vpack.c.b16 %v822, %v821
      %v832 = vpack.c.b16 %v824, %v823
      %841 = vmatprep.subr.bf16.mxu0 0
      %842 = vmatpush1.bf16.msra.mxu0 %v825
      %843 = vmatprep.subr.bf16.mxu0 0
      %844 = vmatpush1.bf16.msra.mxu0 %v826
      %845 = vmatprep.subr.bf16.mxu0 0
      %846 = vmatpush1.bf16.msra.mxu0 %v827
      %847 = vmatprep.subr.bf16.mxu0 0
      %848 = vmatpush1.bf16.msra.mxu0 %v828
      %849 = vmatprep.subr.bf16.mxu0 0
      %850 = vmatpush1.bf16.msra.mxu0 %v829
      %851 = vmatprep.subr.bf16.mxu0 0
      %852 = vmatpush1.bf16.msra.mxu0 %v830
      %853 = vmatprep.subr.bf16.mxu0 0
      %854 = vmatpush1.bf16.msra.mxu0 %v831
      %855 = vmatprep.subr.bf16.mxu0 0
      %856 = vmatpush1.bf16.msra.mxu0 %v832
      %857 = vmatprep.subr.bf16.mxu0 0
      %858 = vmatpush1.bf16.msra.mxu0 0
      %859 = vmatprep.subr.bf16.mxu0 0
      %860 = vmatpush1.bf16.msra.mxu0 0
      %861 = vmatprep.subr.bf16.mxu0 0
      %862 = vmatpush1.bf16.msra.mxu0 0
      %863 = vmatprep.subr.bf16.mxu0 0
      %864 = vmatpush1.bf16.msra.mxu0 0
      %865 = vmatprep.subr.bf16.mxu0 0
      %866 = vmatpush1.bf16.msra.mxu0 0
      %867 = vmatprep.subr.bf16.mxu0 0
      %868 = vmatpush1.bf16.msra.mxu0 0
      %869 = vmatprep.subr.bf16.mxu0 0
      %870 = vmatpush1.bf16.msra.mxu0 0
      %871 = vmatprep.subr.bf16.mxu0 0
      %872 = vmatpush1.bf16.msra.mxu0 0
      %873 = vmatprep.mubr.bf16.mxu0 0
      %874 = vmatmul.mubr.bf16.gmra.mrb[0].mxu0 %v762
      %v875 = vpop.f32.mrb[0].mxu0
      %v876 = vadd.f32 %v791, %v875
      %v877 = vpop.f32.mrb[0].mxu0
      %v878 = vpop.f32.mrb[0].mxu0
      %v879 = vadd.f32 %v791, %v878
      %v880 = vpop.f32.mrb[0].mxu0
      %881 = vmatprep.mubr.bf16.mxu0 0
      %882 = vmatmul.mubr.bf16.gmra.mrb[0].mxu0 %v763
      %v883 = vpop.f32.mrb[0].mxu0
      %v884 = vadd.f32 %v791, %v883
      %v885 = vpop.f32.mrb[0].mxu0
      %v886 = vpop.f32.mrb[0].mxu0
      %v887 = vadd.f32 %v791, %v886
      %v888 = vpop.f32.mrb[0].mxu0
      %889 = vmatprep.mubr.bf16.mxu0 0
      %890 = vmatmul.mubr.bf16.gmra.mrb[0].mxu0 %v764
      %v891 = vpop.f32.mrb[0].mxu0
      %v892 = vadd.f32 %v791, %v891
      %v893 = vpop.f32.mrb[0].mxu0
      %v894 = vpop.f32.mrb[0].mxu0
      %v895 = vadd.f32 %v791, %v894
      %v896 = vpop.f32.mrb[0].mxu0
      %897 = vmatprep.mubr.bf16.mxu0 0
      %898 = vmatmul.mubr.bf16.gmra.mrb[0].mxu0 %v765
      %v899 = vpop.f32.mrb[0].mxu0
      %v900 = vadd.f32 %v791, %v899
      %v901 = vpop.f32.mrb[0].mxu0
      %v902 = vpop.f32.mrb[0].mxu0
      %v903 = vadd.f32 %v791, %v902
      %v904 = vpop.f32.mrb[0].mxu0
      %905 = vmatprep.mubr.bf16.mxu0 0
      %906 = vmatmul.mubr.bf16.gmra.mrb[0].mxu0 %v766
      %v907 = vpop.f32.mrb[0].mxu0
      %v908 = vadd.f32 %v791, %v907
      %v909 = vpop.f32.mrb[0].mxu0
      %v910 = vpop.f32.mrb[0].mxu0
      %v911 = vadd.f32 %v791, %v910
      %v912 = vpop.f32.mrb[0].mxu0
      %913 = vmatprep.mubr.bf16.mxu0 0
      %914 = vmatmul.mubr.bf16.gmra.mrb[0].mxu0 %v767
      %v915 = vpop.f32.mrb[0].mxu0
      %v916 = vadd.f32 %v791, %v915
      %v917 = vpop.f32.mrb[0].mxu0
      %v918 = vpop.f32.mrb[0].mxu0
      %v919 = vadd.f32 %v791, %v918
      %v920 = vpop.f32.mrb[0].mxu0
      %921 = vmatprep.mubr.bf16.mxu0 0
      %922 = vmatmul.mubr.bf16.gmra.mrb[0].mxu0 %v768
      %v923 = vpop.f32.mrb[0].mxu0
      %v924 = vadd.f32 %v791, %v923
      %v925 = vpop.f32.mrb[0].mxu0
      %v926 = vpop.f32.mrb[0].mxu0
      %v927 = vadd.f32 %v791, %v926
      %v928 = vpop.f32.mrb[0].mxu0
      %929 = vmatprep.mubr.bf16.mxu0 0
      %930 = vmatmul.mubr.bf16.gmra.mrb[0].mxu0 %v769
      %v931 = vpop.f32.mrb[0].mxu0
      %v932 = vadd.f32 %v791, %v931
      %v933 = vpop.f32.mrb[0].mxu0
      %v934 = vpop.f32.mrb[0].mxu0
      %v935 = vadd.f32 %v791, %v934
      %v936 = vpop.f32.mrb[0].mxu0
      %937 = vdwg.mxu0
      %v938 = vpack.c.bf16 %v879, %v876
      %v939 = vpack.c.bf16 %v887, %v884
      %v940 = vpack.c.bf16 %v895, %v892
      %v941 = vpack.c.bf16 %v903, %v900
      %v942 = vpack.c.bf16 %v911, %v908
      %v943 = vpack.c.bf16 %v919, %v916
      %v944 = vpack.c.bf16 %v927, %v924
      %v945 = vpack.c.bf16 %v935, %v932
      %v946 = vld [vmem:[%s7] sm:$0xf]
      %v947 = vld [vmem:[%s7 + $0x4] sm:$0xf]
      %v948 = vld [vmem:[%s7 + $0x8] sm:$0xf]
      %v949 = vld [vmem:[%s7 + $0xc] sm:$0xf]
      %v950 = vld [vmem:[%s7 + $0x10] sm:$0xf]
      %v951 = vld [vmem:[%s7 + $0x14] sm:$0xf]
      %v952 = vld [vmem:[%s7 + $0x18] sm:$0xf]
      %v953 = vld [vmem:[%s7 + $0x1c] sm:$0xf]
      %v954 = vld [vmem:[%s7 + $0x20] sm:$0xf]
      %v955 = vld [vmem:[%s7 + $0x24] sm:$0xf]
      %v956 = vld [vmem:[%s7 + $0x28] sm:$0xf]
      %v957 = vld [vmem:[%s7 + $0x2c] sm:$0xf]
      %v958 = vld [vmem:[%s7 + $0x30] sm:$0xf]
      %v959 = vld [vmem:[%s7 + $0x34] sm:$0xf]
      %v960 = vld [vmem:[%s7 + $0x38] sm:$0xf]
      %v961 = vld [vmem:[%s7 + $0x3c] sm:$0xf]
      %v962 = vld [vmem:[%s8] sm:$0x1]
      %v964 = vlaneseq
      %v965 = vshrl.u32 %v964, 7
      %v966 = vsub.s32 0, %v965
      %v967 = vrot.slane %v962, %v966
      %v985 = vunpack.c.l.b16 %v946
      %v986 = vunpack.c.l.b16 %v947
      %v987 = vunpack.c.l.b16 %v948
      %v988 = vunpack.c.l.b16 %v949
      %v989 = vunpack.c.l.b16 %v950
      %v990 = vunpack.c.l.b16 %v951
      %v991 = vunpack.c.l.b16 %v952
      %v992 = vunpack.c.l.b16 %v953
      %v993 = vunpack.c.l.b16 %v954
      %v994 = vunpack.c.l.b16 %v955
      %v995 = vunpack.c.l.b16 %v956
      %v996 = vunpack.c.l.b16 %v957
      %v997 = vunpack.c.l.b16 %v958
      %v998 = vunpack.c.l.b16 %v959
      %v999 = vunpack.c.l.b16 %v960
      %v1000 = vunpack.c.l.b16 %v961
      %v1001 = vpack.c.b16 %v986, %v985
      %v1002 = vpack.c.b16 %v988, %v987
      %v1003 = vpack.c.b16 %v990, %v989
      %v1004 = vpack.c.b16 %v992, %v991
      %v1005 = vpack.c.b16 %v994, %v993
      %v1006 = vpack.c.b16 %v996, %v995
      %v1007 = vpack.c.b16 %v998, %v997
      %v1008 = vpack.c.b16 %v1000, %v999
      %1017 = vmatprep.subr.bf16.mxu0 0
      %1018 = vmatpush1.bf16.msra.mxu0 %v1001
      %1019 = vmatprep.subr.bf16.mxu0 0
      %1020 = vmatpush1.bf16.msra.mxu0 %v1002
      %1021 = vmatprep.subr.bf16.mxu0 0
      %1022 = vmatpush1.bf16.msra.mxu0 %v1003
      %1023 = vmatprep.subr.bf16.mxu0 0
      %1024 = vmatpush1.bf16.msra.mxu0 %v1004
      %1025 = vmatprep.subr.bf16.mxu0 0
      %1026 = vmatpush1.bf16.msra.mxu0 %v1005
      %1027 = vmatprep.subr.bf16.mxu0 0
      %1028 = vmatpush1.bf16.msra.mxu0 %v1006
      %1029 = vmatprep.subr.bf16.mxu0 0
      %1030 = vmatpush1.bf16.msra.mxu0 %v1007
      %1031 = vmatprep.subr.bf16.mxu0 0
      %1032 = vmatpush1.bf16.msra.mxu0 %v1008
      %1033 = vmatprep.subr.bf16.mxu0 0
      %1034 = vmatpush1.bf16.msra.mxu0 0
      %1035 = vmatprep.subr.bf16.mxu0 0
      %1036 = vmatpush1.bf16.msra.mxu0 0
      %1037 = vmatprep.subr.bf16.mxu0 0
      %1038 = vmatpush1.bf16.msra.mxu0 0
      %1039 = vmatprep.subr.bf16.mxu0 0
      %1040 = vmatpush1.bf16.msra.mxu0 0
      %1041 = vmatprep.subr.bf16.mxu0 0
      %1042 = vmatpush1.bf16.msra.mxu0 0
      %1043 = vmatprep.subr.bf16.mxu0 0
      %1044 = vmatpush1.bf16.msra.mxu0 0
      %1045 = vmatprep.subr.bf16.mxu0 0
      %1046 = vmatpush1.bf16.msra.mxu0 0
      %1047 = vmatprep.subr.bf16.mxu0 0
      %1048 = vmatpush1.bf16.msra.mxu0 0
      %1049 = vmatprep.mubr.bf16.mxu0 0
      %1050 = vmatmul.mubr.bf16.gmra.mrb[0].mxu0 %v938
      %v1051 = vpop.f32.mrb[0].mxu0
      %v1052 = vadd.f32 %v967, %v1051
      %v1053 = vpop.f32.mrb[0].mxu0
      %v1054 = vpop.f32.mrb[0].mxu0
      %v1055 = vadd.f32 %v967, %v1054
      %v1056 = vpop.f32.mrb[0].mxu0
      %1057 = vmatprep.mubr.bf16.mxu0 0
      %1058 = vmatmul.mubr.bf16.gmra.mrb[0].mxu0 %v939
      %v1059 = vpop.f32.mrb[0].mxu0
      %v1060 = vadd.f32 %v967, %v1059
      %v1061 = vpop.f32.mrb[0].mxu0
      %v1062 = vpop.f32.mrb[0].mxu0
      %v1063 = vadd.f32 %v967, %v1062
      %v1064 = vpop.f32.mrb[0].mxu0
      %1065 = vmatprep.mubr.bf16.mxu0 0
      %1066 = vmatmul.mubr.bf16.gmra.mrb[0].mxu0 %v940
      %v1067 = vpop.f32.mrb[0].mxu0
      %v1068 = vadd.f32 %v967, %v1067
      %v1069 = vpop.f32.mrb[0].mxu0
      %v1070 = vpop.f32.mrb[0].mxu0
      %v1071 = vadd.f32 %v967, %v1070
      %v1072 = vpop.f32.mrb[0].mxu0
      %1073 = vmatprep.mubr.bf16.mxu0 0
      %1074 = vmatmul.mubr.bf16.gmra.mrb[0].mxu0 %v941
      %v1075 = vpop.f32.mrb[0].mxu0
      %v1076 = vadd.f32 %v967, %v1075
      %v1077 = vpop.f32.mrb[0].mxu0
      %v1078 = vpop.f32.mrb[0].mxu0
      %v1079 = vadd.f32 %v967, %v1078
      %v1080 = vpop.f32.mrb[0].mxu0
      %1081 = vmatprep.mubr.bf16.mxu0 0
      %1082 = vmatmul.mubr.bf16.gmra.mrb[0].mxu0 %v942
      %v1083 = vpop.f32.mrb[0].mxu0
      %v1084 = vadd.f32 %v967, %v1083
      %v1085 = vpop.f32.mrb[0].mxu0
      %v1086 = vpop.f32.mrb[0].mxu0
      %v1087 = vadd.f32 %v967, %v1086
      %v1088 = vpop.f32.mrb[0].mxu0
      %1089 = vmatprep.mubr.bf16.mxu0 0
      %1090 = vmatmul.mubr.bf16.gmra.mrb[0].mxu0 %v943
      %v1091 = vpop.f32.mrb[0].mxu0
      %v1092 = vadd.f32 %v967, %v1091
      %v1093 = vpop.f32.mrb[0].mxu0
      %v1094 = vpop.f32.mrb[0].mxu0
      %v1095 = vadd.f32 %v967, %v1094
      %v1096 = vpop.f32.mrb[0].mxu0
      %1097 = vmatprep.mubr.bf16.mxu0 0
      %1098 = vmatmul.mubr.bf16.gmra.mrb[0].mxu0 %v944
      %v1099 = vpop.f32.mrb[0].mxu0
      %v1100 = vadd.f32 %v967, %v1099
      %v1101 = vpop.f32.mrb[0].mxu0
      %v1102 = vpop.f32.mrb[0].mxu0
      %v1103 = vadd.f32 %v967, %v1102
      %v1104 = vpop.f32.mrb[0].mxu0
      %1105 = vmatprep.mubr.bf16.mxu0 0
      %1106 = vmatmul.mubr.bf16.gmra.mrb[0].mxu0 %v945
      %v1107 = vpop.f32.mrb[0].mxu0
      %v1108 = vadd.f32 %v967, %v1107
      %v1109 = vpop.f32.mrb[0].mxu0
      %v1110 = vpop.f32.mrb[0].mxu0
      %v1111 = vadd.f32 %v967, %v1110
      %v1112 = vpop.f32.mrb[0].mxu0
      %1113 = vdwg.mxu0
      %v1114 = vpack.c.bf16 %v1055, %v1052
      %v1115 = vpack.c.bf16 %v1063, %v1060
      %v1116 = vpack.c.bf16 %v1071, %v1068
      %v1117 = vpack.c.bf16 %v1079, %v1076
      %v1118 = vpack.c.bf16 %v1087, %v1084
      %v1119 = vpack.c.bf16 %v1095, %v1092
      %v1120 = vpack.c.bf16 %v1103, %v1100
      %v1121 = vpack.c.bf16 %v1111, %v1108
      %v1130 = vunpack.c.l.b16 %v1114
      %v1131 = vunpack.c.h.b16 %v1114
      %v1132 = vunpack.c.l.b16 %v1115
      %v1133 = vunpack.c.h.b16 %v1115
      %v1134 = vunpack.c.l.b16 %v1116
      %v1135 = vunpack.c.h.b16 %v1116
      %v1136 = vunpack.c.l.b16 %v1117
      %v1137 = vunpack.c.h.b16 %v1117
      %v1138 = vunpack.c.l.b16 %v1118
      %v1139 = vunpack.c.h.b16 %v1118
      %v1140 = vunpack.c.l.b16 %v1119
      %v1141 = vunpack.c.h.b16 %v1119
      %v1142 = vunpack.c.l.b16 %v1120
      %v1143 = vunpack.c.h.b16 %v1120
      %v1144 = vunpack.c.l.b16 %v1121
      %v1145 = vunpack.c.h.b16 %v1121
      %v1146 = vpack.c.b16 %v1130, %v1130
      %v1147 = vpack.c.b16 %v1131, %v1131
      %v1148 = vpack.c.b16 %v1132, %v1132
      %v1149 = vpack.c.b16 %v1133, %v1133
      %v1150 = vpack.c.b16 %v1134, %v1134
      %v1151 = vpack.c.b16 %v1135, %v1135
      %v1152 = vpack.c.b16 %v1136, %v1136
      %v1153 = vpack.c.b16 %v1137, %v1137
      %v1154 = vpack.c.b16 %v1138, %v1138
      %v1155 = vpack.c.b16 %v1139, %v1139
      %v1156 = vpack.c.b16 %v1140, %v1140
      %v1157 = vpack.c.b16 %v1141, %v1141
      %v1158 = vpack.c.b16 %v1142, %v1142
      %v1159 = vpack.c.b16 %v1143, %v1143
      %v1160 = vpack.c.b16 %v1144, %v1144
      %v1161 = vpack.c.b16 %v1145, %v1145
      %1178 = vst [vmem:[%s334] sm:$0xf] %v1146
      %1179 = vst [vmem:[%s334 + $0x4] sm:$0xf] %v1147
      %1180 = vst [vmem:[%s334 + $0x8] sm:$0xf] %v1148
      %1181 = vst [vmem:[%s334 + $0xc] sm:$0xf] %v1149
      %1182 = vst [vmem:[%s334 + $0x10] sm:$0xf] %v1150
      %1183 = vst [vmem:[%s334 + $0x14] sm:$0xf] %v1151
      %1184 = vst [vmem:[%s334 + $0x18] sm:$0xf] %v1152
      %1185 = vst [vmem:[%s334 + $0x1c] sm:$0xf] %v1153
      %1186 = vst [vmem:[%s334 + $0x20] sm:$0xf] %v1154
      %1187 = vst [vmem:[%s334 + $0x24] sm:$0xf] %v1155
      %1188 = vst [vmem:[%s334 + $0x28] sm:$0xf] %v1156
      %1189 = vst [vmem:[%s334 + $0x2c] sm:$0xf] %v1157
      %1190 = vst [vmem:[%s334 + $0x30] sm:$0xf] %v1158
      %1191 = vst [vmem:[%s334 + $0x34] sm:$0xf] %v1159
      %1192 = vst [vmem:[%s334 + $0x38] sm:$0xf] %v1160
      %1193 = vst [vmem:[%s334 + $0x3c] sm:$0xf] %v1161
      %s1194 = smul.u32 16, %s20
      %p1195 = scmp.lt.s32.totalorder %s1194, 31
      %s1196 = scalar_select %p1195, %s1194, 31
      %s1197 = smul.addr %s1196, 4
      %s1198 = scalar_lea.vmem %s9, %s1197
      // Predicated region
      $region57: #{enc_model_forward.1} parent=55 // pred_check
        %p1199 = pneg %p232
      $region58: #{enc_model_forward.1} parent=55 // pred_check_branch
        %1201 = sbr.rel (%p1199) target = $region60
      $region59: #{enc_model_forward.1} parent=55 // pred_region
        %s1202 = smul.u32 16, %s20
      $region60: #{enc_model_forward.1} parent=55 // pred_fallthru
        _
    $region56: #{enc_model_forward.1} parent=5 // pred_fallthru
      _
    %p1203 = scmp.le.s32.totalorder 2, %s15
    // Predicated region
    $region61: #{enc_model_forward.1} parent=5 // pred_check
      %p1204 = pneg %p1203
    $region62: #{enc_model_forward.1} parent=5 // pred_check_branch
      %1206 = sbr.rel (%p1204) target = $region64
    $region63: #{enc_model_forward.1} parent=5 // pred_region
      %s1207 = ssub.s32 %s15, 2
      // Predicated region
      $region65: #{enc_model_forward.1} parent=63 // pred_check
        %p1208 = pneg %p238
      $region66: #{enc_model_forward.1} parent=63 // pred_check_branch
        %1210 = sbr.rel (%p1208) target = $region68
      $region67: #{enc_model_forward.1} parent=63 // pred_region
        %s1211 = smul.u32 16, %s21
        %p1212 = scmp.lt.s32.totalorder %s1211, 31
        %s1213 = scalar_select %p1212, %s1211, 31
        %s1214 = smul.addr %s1213, 4
        %s1215 = scalar_lea.vmem %s9, %s1214
      $region68: #{enc_model_forward.1} parent=63 // pred_fallthru
        _
    $region64: #{enc_model_forward.1} parent=5 // pred_fallthru
      _
  $region6: #{enc_model_forward.1} parent=0 // loop_footer
    %s19 = sadd.s32 1, %s15
  $region7: #{enc_model_forward.1} parent=0 // loop_footer_branch
    %14 = sbr.rel target = $region3
  $region8: #{enc_model_forward.1} parent=0 // loop_exit
    _

</llo_original>
